<compile_context>
chip_gen: v7x
topology: tpu7x:2x2x1
jax: 0.10.0
libtpu: 0.0.40
codegen_flags: <defaults>
</compile_context>

<pallas_src>
import jax
import jax.numpy as jnp
from jax.experimental import pallas as pl
from jax.experimental.pallas import tpu as pltpu


# VMEM budgets valid across v5e / v6e (128 MiB physical) and v7x (64 MiB).
_VMEM_LIMIT_BYTES = 48 * 1024 * 1024    # raised scoped VMEM limit
_BLOCK_VMEM_BUDGET = 20 * 1024 * 1024   # total double-buffered blocks + acc

# Tile targets (multiples of 256 -> MXU-matched on v6e/v7x, OK on v5e).
_TM_TARGET = 256
_TN_TARGET = 256
_TK_TARGET = 512

_LANE_DENSE_MAX_TB = 32    # unroll bound for the lane-dense (N < 128) path
_GENERAL_MAX_TB = 256      # batch-block bound for the general path


def _pick_tile(dim, target, align):
    """Largest tile <= target that divides dim and is a multiple of align,
    otherwise the full dim (block == full array dim is always legal)."""
    if dim <= target:
        return dim
    t = (target // align) * align
    while t >= align:
        if dim % t == 0:
            return t
        t -= align
    return dim


def _pick_batch_tile(bt, per_batch_bytes, cap):
    """Largest divisor of bt, capped by `cap` and the VMEM block budget."""
    max_tb = max(1, min(cap, _BLOCK_VMEM_BUDGET // max(per_batch_bytes, 1), bt))
    for tb in range(int(max_tb), 0, -1):
        if bt % tb == 0:
            return tb
    return 1


# ----------------------------------------------------------------------------
# Kernels
# ----------------------------------------------------------------------------
def _bmm_kernel(a_ref, b_ref, o_ref):
    # a_ref: (TB, tm, K), b_ref: (TB, K, tn), o_ref: (TB, tm, tn). No K tiling.
    o_ref[...] = jnp.einsum(
        "bmk,bkn->bmn", a_ref[...], b_ref[...],
        preferred_element_type=jnp.float32,
    ).astype(o_ref.dtype)


def _bmm_acc_kernel(a_ref, b_ref, o_ref, acc_ref):
    # K-tiled: accumulate partial products in an f32 VMEM scratch accumulator.
    @pl.when(pl.program_id(3) == 0)
    def _():
        acc_ref[...] = jnp.zeros_like(acc_ref)

    acc_ref[...] += jnp.einsum(
        "bmk,bkn->bmn", a_ref[...], b_ref[...],
        preferred_element_type=jnp.float32,
    )

    @pl.when(pl.program_id(3) == pl.num_programs(3) - 1)
    def _():
        o_ref[...] = acc_ref[...].astype(o_ref.dtype)


def _make_lane_dense_kernel(tb):
    # a_ref: (TB, M, K), b_ref: (TB, K, N), o_ref: (M, TB*N) lane-dense slab.
    def kernel(a_ref, b_ref, o_ref):
        parts = [
            jnp.dot(a_ref[i], b_ref[i], preferred_element_type=jnp.float32)
            for i in range(tb)
        ]
        out = parts[0] if tb == 1 else jnp.concatenate(parts, axis=-1)
        o_ref[...] = out.astype(o_ref.dtype)
    return kernel


# ----------------------------------------------------------------------------
# Wrappers
# ----------------------------------------------------------------------------
def _bmm_lane_dense(lhs_f, rhs_f, out_dtype):
    """N < 128 path: pack TB batch results along the lane axis."""
    bt, m, k = lhs_f.shape
    _, _, n = rhs_f.shape
    per_batch_bytes = 2 * 4 * (m * k + k * n + m * n)
    tb = _pick_batch_tile(bt, per_batch_bytes, _LANE_DENSE_MAX_TB)
    nb = bt // tb

    out = pl.pallas_call(
        _make_lane_dense_kernel(tb),
        out_shape=jax.ShapeDtypeStruct((nb, m, tb * n), out_dtype),
        grid_spec=pltpu.PrefetchScalarGridSpec(
            num_scalar_prefetch=0,
            grid=(nb,),
            in_specs=[
                pl.BlockSpec((tb, m, k), lambda b: (b, 0, 0)),
                pl.BlockSpec((tb, k, n), lambda b: (b, 0, 0)),
            ],
            # Leading grid dim squeezed; kernel sees a lane-dense (M, TB*N) slab.
            out_specs=pl.BlockSpec((None, m, tb * n), lambda b: (b, 0, 0)),
        ),
        compiler_params=pltpu.CompilerParams(
            dimension_semantics=("parallel",),
            vmem_limit_bytes=_VMEM_LIMIT_BYTES,
        ),
    )(lhs_f, rhs_f)

    # Undo the lane packing outside the kernel: (nb, m, tb*n) -> (bt, m, n).
    return out.reshape(nb, m, tb, n).transpose(0, 2, 1, 3).reshape(bt, m, n)


def _bmm_general(lhs_f, rhs_f, out_dtype):
    """General batched matmul with (batch, M, N, K) tiling."""
    bt, m, k = lhs_f.shape
    _, _, n = rhs_f.shape

    tm = _pick_tile(m, _TM_TARGET, 8)
    tk = _pick_tile(k, _TK_TARGET, 128)
    tn = _pick_tile(n, _TN_TARGET, 128)

    per_batch_bytes = 4 * (2 * (tm * tk + tk * tn + tm * tn) + tm * tn)
    tb = _pick_batch_tile(bt, per_batch_bytes, _GENERAL_MAX_TB)

    nb, nm, nn, nk = bt // tb, m // tm, n // tn, k // tk

    if nk == 1:
        grid = (nb, nm, nn)
        kernel = _bmm_kernel
        in_specs = [
            pl.BlockSpec((tb, tm, tk), lambda b, i, j: (b, i, 0)),
            pl.BlockSpec((tb, tk, tn), lambda b, i, j: (b, 0, j)),
        ]
        out_spec = pl.BlockSpec((tb, tm, tn), lambda b, i, j: (b, i, j))
        scratch = []
        dims = ("parallel", "parallel", "parallel")
    else:
        grid = (nb, nm, nn, nk)
        kernel = _bmm_acc_kernel
        in_specs = [
            pl.BlockSpec((tb, tm, tk), lambda b, i, j, kk: (b, i, kk)),
            pl.BlockSpec((tb, tk, tn), lambda b, i, j, kk: (b, kk, j)),
        ]
        out_spec = pl.BlockSpec((tb, tm, tn), lambda b, i, j, kk: (b, i, j))
        scratch = [pltpu.VMEM((tb, tm, tn), jnp.float32)]
        # Reduction (K) axis last, marked arbitrary; batch/M/N are parallel.
        dims = ("parallel", "parallel", "parallel", "arbitrary")

    return pl.pallas_call(
        kernel,
        out_shape=jax.ShapeDtypeStruct((bt, m, n), out_dtype),
        grid_spec=pltpu.PrefetchScalarGridSpec(
            num_scalar_prefetch=0,
            grid=grid,
            in_specs=in_specs,
            out_specs=out_spec,
            scratch_shapes=scratch,
        ),
        compiler_params=pltpu.CompilerParams(
            dimension_semantics=dims,
            vmem_limit_bytes=_VMEM_LIMIT_BYTES,
        ),
    )(lhs_f, rhs_f)


def matmul_single_dynamic_batch_dim(lhs: jax.Array, rhs: jax.Array) -> jax.Array:
    """torch.matmul semantics for rank-4 [4, B, M, K] @ [4, B, K, N]."""
    assert lhs.ndim == 4 and rhs.ndim == 4
    d0, b, m, k = lhs.shape
    d0r, br, kr, n = rhs.shape
    assert d0 == d0r and b == br and k == kr, "batch / contraction dims must match"

    out_dtype = jnp.result_type(lhs.dtype, rhs.dtype)
    bt = d0 * b
    lhs_f = lhs.reshape(bt, m, k)
    rhs_f = rhs.reshape(bt, k, n)

    # Lane-dense path when the output's last dim is narrower than a vreg
    # (N < 128) and a per-batch slice trivially fits VMEM; otherwise the
    # general tiled path (which is already lane-dense when N >= 128).
    lane_dense_ok = (
        n < 128 and 2 * 4 * (m * k + k * n + m * n) <= _BLOCK_VMEM_BUDGET
    )
    if lane_dense_ok:
        out_f = _bmm_lane_dense(lhs_f, rhs_f, out_dtype)
    else:
        out_f = _bmm_general(lhs_f, rhs_f, out_dtype)

    return out_f.reshape(d0, b, m, n)


if __name__ == "__main__":
    key = jax.random.PRNGKey(0)
    k1, k2, k3, k4, k5, k6 = jax.random.split(key, 6)
    HI = jax.lax.Precision.HIGHEST

    # Primary module-consistent small shapes (exercises the lane-dense path).
    B, M, K, N = 2, 8, 16, 32
    lhs = jax.random.normal(k1, (4, B, M, K), dtype=jnp.float32)
    rhs = jax.random.normal(k2, (4, B, K, N), dtype=jnp.float32)
    out = jax.block_until_ready(matmul_single_dynamic_batch_dim(lhs, rhs))
    ref = jnp.matmul(lhs, rhs, precision=HI)
    assert out.shape == (4, B, M, N)
    assert jnp.allclose(out, ref, atol=1e-4, rtol=1e-5)

    # General path, wide N, single K block.
    lhs2 = jax.random.normal(k3, (4, 2, 16, 64), dtype=jnp.float32)
    rhs2 = jax.random.normal(k4, (4, 2, 64, 128), dtype=jnp.float32)
    out2 = jax.block_until_ready(matmul_single_dynamic_batch_dim(lhs2, rhs2))
    assert jnp.allclose(out2, jnp.matmul(lhs2, rhs2, precision=HI),
                        atol=1e-3, rtol=1e-4)

    # General path with K tiling + VMEM accumulator (K > 512).
    lhs3 = jax.random.normal(k5, (4, 1, 8, 1024), dtype=jnp.float32)
    rhs3 = jax.random.normal(k6, (4, 1, 1024, 128), dtype=jnp.float32)
    out3 = jax.block_until_ready(matmul_single_dynamic_batch_dim(lhs3, rhs3))
    assert jnp.allclose(out3, jnp.matmul(lhs3, rhs3, precision=HI),
                        atol=1e-2, rtol=1e-3)

    print("KERNEL_OK")
</pallas_src>

<mosaic_0001>
module attributes {stable_mosaic.version = 11 : i64} {
  func.func @kernel(%arg0: i32, %arg1: memref<8x8x16xf32, #tpu.memory_space<vmem>>, %arg2: memref<8x16x32xf32, #tpu.memory_space<vmem>>, %arg3: memref<1x8x256xf32, #tpu.memory_space<vmem>>) attributes {dimension_semantics = [#tpu.dimension_semantics<parallel>], iteration_bounds = array<i64: 1>, scalar_prefetch = 0 : i64, scratch_operands = 0 : i64, tpu.core_type = #tpu.core_type<tc>, window_params = [{transform_indices = @transform_0, window_bounds = array<i64: 8, 8, 16>}, {transform_indices = @transform_1, window_bounds = array<i64: 8, 16, 32>}, {transform_indices = @transform_2, window_bounds = array<i64: 1, 8, 256>}]} {
    %c0 = arith.constant 0 : index
    %c0_0 = arith.constant 0 : index
    %c0_1 = arith.constant 0 : index
    %0 = vector.load %arg1[%c0, %c0_0, %c0_1] : memref<8x8x16xf32, #tpu.memory_space<vmem>>, vector<1x8x16xf32>
    %1 = vector.shape_cast %0 : vector<1x8x16xf32> to vector<8x16xf32>
    %c0_2 = arith.constant 0 : index
    %c0_3 = arith.constant 0 : index
    %c0_4 = arith.constant 0 : index
    %2 = vector.load %arg2[%c0_2, %c0_3, %c0_4] : memref<8x16x32xf32, #tpu.memory_space<vmem>>, vector<1x16x32xf32>
    %3 = vector.shape_cast %2 : vector<1x16x32xf32> to vector<16x32xf32>
    %cst = arith.constant dense<0.000000e+00> : vector<8x32xf32>
    %4 = tpu.matmul %1, %3, %cst {dimension_numbers = #tpu.dot_dimension_numbers<[1], [0], [0], [1], [0, 0, 1, 1], [], []>} : vector<8x16xf32>, vector<16x32xf32>, vector<8x32xf32> -> vector<8x32xf32>
    %c1 = arith.constant 1 : index
    %c0_5 = arith.constant 0 : index
    %c0_6 = arith.constant 0 : index
    %5 = vector.load %arg1[%c1, %c0_5, %c0_6] : memref<8x8x16xf32, #tpu.memory_space<vmem>>, vector<1x8x16xf32>
    %6 = vector.shape_cast %5 : vector<1x8x16xf32> to vector<8x16xf32>
    %c1_7 = arith.constant 1 : index
    %c0_8 = arith.constant 0 : index
    %c0_9 = arith.constant 0 : index
    %7 = vector.load %arg2[%c1_7, %c0_8, %c0_9] : memref<8x16x32xf32, #tpu.memory_space<vmem>>, vector<1x16x32xf32>
    %8 = vector.shape_cast %7 : vector<1x16x32xf32> to vector<16x32xf32>
    %cst_10 = arith.constant dense<0.000000e+00> : vector<8x32xf32>
    %9 = tpu.matmul %6, %8, %cst_10 {dimension_numbers = #tpu.dot_dimension_numbers<[1], [0], [0], [1], [0, 0, 1, 1], [], []>} : vector<8x16xf32>, vector<16x32xf32>, vector<8x32xf32> -> vector<8x32xf32>
    %c2 = arith.constant 2 : index
    %c0_11 = arith.constant 0 : index
    %c0_12 = arith.constant 0 : index
    %10 = vector.load %arg1[%c2, %c0_11, %c0_12] : memref<8x8x16xf32, #tpu.memory_space<vmem>>, vector<1x8x16xf32>
    %11 = vector.shape_cast %10 : vector<1x8x16xf32> to vector<8x16xf32>
    %c2_13 = arith.constant 2 : index
    %c0_14 = arith.constant 0 : index
    %c0_15 = arith.constant 0 : index
    %12 = vector.load %arg2[%c2_13, %c0_14, %c0_15] : memref<8x16x32xf32, #tpu.memory_space<vmem>>, vector<1x16x32xf32>
    %13 = vector.shape_cast %12 : vector<1x16x32xf32> to vector<16x32xf32>
    %cst_16 = arith.constant dense<0.000000e+00> : vector<8x32xf32>
    %14 = tpu.matmul %11, %13, %cst_16 {dimension_numbers = #tpu.dot_dimension_numbers<[1], [0], [0], [1], [0, 0, 1, 1], [], []>} : vector<8x16xf32>, vector<16x32xf32>, vector<8x32xf32> -> vector<8x32xf32>
    %c3 = arith.constant 3 : index
    %c0_17 = arith.constant 0 : index
    %c0_18 = arith.constant 0 : index
    %15 = vector.load %arg1[%c3, %c0_17, %c0_18] : memref<8x8x16xf32, #tpu.memory_space<vmem>>, vector<1x8x16xf32>
    %16 = vector.shape_cast %15 : vector<1x8x16xf32> to vector<8x16xf32>
    %c3_19 = arith.constant 3 : index
    %c0_20 = arith.constant 0 : index
    %c0_21 = arith.constant 0 : index
    %17 = vector.load %arg2[%c3_19, %c0_20, %c0_21] : memref<8x16x32xf32, #tpu.memory_space<vmem>>, vector<1x16x32xf32>
    %18 = vector.shape_cast %17 : vector<1x16x32xf32> to vector<16x32xf32>
    %cst_22 = arith.constant dense<0.000000e+00> : vector<8x32xf32>
    %19 = tpu.matmul %16, %18, %cst_22 {dimension_numbers = #tpu.dot_dimension_numbers<[1], [0], [0], [1], [0, 0, 1, 1], [], []>} : vector<8x16xf32>, vector<16x32xf32>, vector<8x32xf32> -> vector<8x32xf32>
    %c4 = arith.constant 4 : index
    %c0_23 = arith.constant 0 : index
    %c0_24 = arith.constant 0 : index
    %20 = vector.load %arg1[%c4, %c0_23, %c0_24] : memref<8x8x16xf32, #tpu.memory_space<vmem>>, vector<1x8x16xf32>
    %21 = vector.shape_cast %20 : vector<1x8x16xf32> to vector<8x16xf32>
    %c4_25 = arith.constant 4 : index
    %c0_26 = arith.constant 0 : index
    %c0_27 = arith.constant 0 : index
    %22 = vector.load %arg2[%c4_25, %c0_26, %c0_27] : memref<8x16x32xf32, #tpu.memory_space<vmem>>, vector<1x16x32xf32>
    %23 = vector.shape_cast %22 : vector<1x16x32xf32> to vector<16x32xf32>
    %cst_28 = arith.constant dense<0.000000e+00> : vector<8x32xf32>
    %24 = tpu.matmul %21, %23, %cst_28 {dimension_numbers = #tpu.dot_dimension_numbers<[1], [0], [0], [1], [0, 0, 1, 1], [], []>} : vector<8x16xf32>, vector<16x32xf32>, vector<8x32xf32> -> vector<8x32xf32>
    %c5 = arith.constant 5 : index
    %c0_29 = arith.constant 0 : index
    %c0_30 = arith.constant 0 : index
    %25 = vector.load %arg1[%c5, %c0_29, %c0_30] : memref<8x8x16xf32, #tpu.memory_space<vmem>>, vector<1x8x16xf32>
    %26 = vector.shape_cast %25 : vector<1x8x16xf32> to vector<8x16xf32>
    %c5_31 = arith.constant 5 : index
    %c0_32 = arith.constant 0 : index
    %c0_33 = arith.constant 0 : index
    %27 = vector.load %arg2[%c5_31, %c0_32, %c0_33] : memref<8x16x32xf32, #tpu.memory_space<vmem>>, vector<1x16x32xf32>
    %28 = vector.shape_cast %27 : vector<1x16x32xf32> to vector<16x32xf32>
    %cst_34 = arith.constant dense<0.000000e+00> : vector<8x32xf32>
    %29 = tpu.matmul %26, %28, %cst_34 {dimension_numbers = #tpu.dot_dimension_numbers<[1], [0], [0], [1], [0, 0, 1, 1], [], []>} : vector<8x16xf32>, vector<16x32xf32>, vector<8x32xf32> -> vector<8x32xf32>
    %c6 = arith.constant 6 : index
    %c0_35 = arith.constant 0 : index
    %c0_36 = arith.constant 0 : index
    %30 = vector.load %arg1[%c6, %c0_35, %c0_36] : memref<8x8x16xf32, #tpu.memory_space<vmem>>, vector<1x8x16xf32>
    %31 = vector.shape_cast %30 : vector<1x8x16xf32> to vector<8x16xf32>
    %c6_37 = arith.constant 6 : index
    %c0_38 = arith.constant 0 : index
    %c0_39 = arith.constant 0 : index
    %32 = vector.load %arg2[%c6_37, %c0_38, %c0_39] : memref<8x16x32xf32, #tpu.memory_space<vmem>>, vector<1x16x32xf32>
    %33 = vector.shape_cast %32 : vector<1x16x32xf32> to vector<16x32xf32>
    %cst_40 = arith.constant dense<0.000000e+00> : vector<8x32xf32>
    %34 = tpu.matmul %31, %33, %cst_40 {dimension_numbers = #tpu.dot_dimension_numbers<[1], [0], [0], [1], [0, 0, 1, 1], [], []>} : vector<8x16xf32>, vector<16x32xf32>, vector<8x32xf32> -> vector<8x32xf32>
    %c7 = arith.constant 7 : index
    %c0_41 = arith.constant 0 : index
    %c0_42 = arith.constant 0 : index
    %35 = vector.load %arg1[%c7, %c0_41, %c0_42] : memref<8x8x16xf32, #tpu.memory_space<vmem>>, vector<1x8x16xf32>
    %36 = vector.shape_cast %35 : vector<1x8x16xf32> to vector<8x16xf32>
    %c7_43 = arith.constant 7 : index
    %c0_44 = arith.constant 0 : index
    %c0_45 = arith.constant 0 : index
    %37 = vector.load %arg2[%c7_43, %c0_44, %c0_45] : memref<8x16x32xf32, #tpu.memory_space<vmem>>, vector<1x16x32xf32>
    %38 = vector.shape_cast %37 : vector<1x16x32xf32> to vector<16x32xf32>
    %cst_46 = arith.constant dense<0.000000e+00> : vector<8x32xf32>
    %39 = tpu.matmul %36, %38, %cst_46 {dimension_numbers = #tpu.dot_dimension_numbers<[1], [0], [0], [1], [0, 0, 1, 1], [], []>} : vector<8x16xf32>, vector<16x32xf32>, vector<8x32xf32> -> vector<8x32xf32>
    %40 = tpu.concatenate %4, %9, %14, %19, %24, %29, %34, %39 in 1 : vector<8x32xf32>, vector<8x32xf32>, vector<8x32xf32>, vector<8x32xf32>, vector<8x32xf32>, vector<8x32xf32>, vector<8x32xf32>, vector<8x32xf32> -> vector<8x256xf32>
    %c0_47 = arith.constant 0 : index
    %c0_48 = arith.constant 0 : index
    %c0_49 = arith.constant 0 : index
    %41 = vector.load %arg3[%c0_47, %c0_48, %c0_49] : memref<1x8x256xf32, #tpu.memory_space<vmem>>, vector<1x8x256xf32>
    %42 = vector.shape_cast %41 : vector<1x8x256xf32> to vector<8x256xf32>
    %43 = vector.shape_cast %40 : vector<8x256xf32> to vector<1x8x256xf32>
    tpu.vector_store %arg3[%c0_47, %c0_48, %c0_49], %43 {strides = array<i32>} : memref<1x8x256xf32, #tpu.memory_space<vmem>>, vector<1x8x256xf32>,
    return
  }
  func.func @transform_0(%arg0: i32) -> (i32, i32, i32) {
    %c0_i32 = arith.constant 0 : i32
    %c0_i32_0 = arith.constant 0 : i32
    %c0_i32_1 = arith.constant 0 : i32
    return %arg0, %c0_i32, %c0_i32_0 : i32, i32, i32
  }
  func.func @transform_1(%arg0: i32) -> (i32, i32, i32) {
    %c0_i32 = arith.constant 0 : i32
    %c0_i32_0 = arith.constant 0 : i32
    %c0_i32_1 = arith.constant 0 : i32
    return %arg0, %c0_i32, %c0_i32_0 : i32, i32, i32
  }
  func.func @transform_2(%arg0: i32) -> (i32, i32, i32) {
    %c0_i32 = arith.constant 0 : i32
    %c0_i32_0 = arith.constant 0 : i32
    %c0_i32_1 = arith.constant 0 : i32
    return %arg0, %c0_i32, %c0_i32_0 : i32, i32, i32
  }
}

</mosaic_0001>

<llo_original>
// kernel: tpu_custom_call.1
$region0: #{tpu_custom_call.1}
  #allocation0 [shape = 'u32[]', space=smem, size = 0x4, offset = 0x4, fixed_abs, tag = 'smem constant byte address 0x4 - core index']
  #allocation1 [shape = 'u32[144,128]{1,0:T(1,128)}', space=vmem, size = 0x12000, scoped, tag = 'internal scratch']
  %s0 = inlined_call_operand.hbm [shape: f32[8,8,16], index: 0, kind: input, shape index: {}]
  %s1 = inlined_call_operand.hbm [shape: f32[8,16,32], index: 1, kind: input, shape index: {}]
  %s2 = inlined_call_operand.hbm [shape: f32[1,8,256], index: 2, kind: output, shape index: {}]
  %s3 = sld [smem:[#allocation0]]
  $region26: #{tpu_custom_call.1} parent=0
    _
  %s5 = ssub.s32 1, %s3
  %s6 = scalar_select 0, %s5, %s3
  $region1: #{tpu_custom_call.1} parent=0
    #allocation2 [shape = 'u8[32768]{0}', space=vmem, size = 0x8000, scoped, tag = 'input window, operand 0, single buffered']
    #allocation3 [shape = 's32[1]{0}', space=sflag, size = 0x4, scoped, tag = 'scoped memory for tpu_custom_call.1']
    #allocation4 [shape = 's32[1]{0}', space=sflag, size = 0x4, scoped, tag = 'scoped memory for tpu_custom_call.1']
    #allocation5 [shape = 'u8[65536]{0}', space=vmem, size = 0x10000, scoped, tag = 'input window, operand 1, single buffered']
    #allocation6 [shape = 's32[1]{0}', space=sflag, size = 0x4, scoped, tag = 'scoped memory for tpu_custom_call.1']
    #allocation7 [shape = 'u8[8192]{0}', space=vmem, size = 0x2000, scoped, tag = 'output window, operand 0, single buffered']
    %7 = vsyncpa [#allocation3], 0
    %8 = vsyncpa [#allocation6], 0
    %9 = vsyncpa [#allocation4], 0
    // Predicated region
    $region2: #{tpu_custom_call.1} parent=1 // pred_check
      _
    $region3: #{tpu_custom_call.1} parent=1 // pred_check_branch
      %11 = sbr.rel (0) target = $region5
    $region4: #{tpu_custom_call.1} parent=1 // pred_region
      %s13 = ssub.s32 1024, 1024
      %14 = vsyncadd [#allocation3], %s13
      %s15 = sshll.u32 [#allocation2], 4
      %s16 = int_to_ptr.vmem [resolvable:$true] %s15
      %21 = dma.hbm_to_vmem [thread:$0]  %s0, 1024, %s16, [#allocation3], 128, 128, 8
    $region5: #{tpu_custom_call.1} parent=1 // pred_fallthru
      _
    // Predicated region
    $region6: #{tpu_custom_call.1} parent=1 // pred_check
      _
    $region7: #{tpu_custom_call.1} parent=1 // pred_check_branch
      %23 = sbr.rel (0) target = $region9
    $region8: #{tpu_custom_call.1} parent=1 // pred_region
      %s25 = ssub.s32 2048, 2048
      %26 = vsyncadd [#allocation6], %s25
      %s27 = sshll.u32 [#allocation5], 4
      %s28 = int_to_ptr.vmem [resolvable:$true] %s27
      %33 = dma.hbm_to_vmem [thread:$0]  %s1, 2048, %s28, [#allocation6], 128, 128, 8
    $region9: #{tpu_custom_call.1} parent=1 // pred_fallthru
      _
    // Predicated region
    $region10: #{tpu_custom_call.1} parent=1 // pred_check
      _
    $region11: #{tpu_custom_call.1} parent=1 // pred_check_branch
      %35 = sbr.rel (0) target = $region13
    $region12: #{tpu_custom_call.1} parent=1 // pred_region
      %36 = dma.done [#allocation3], 1024
    $region13: #{tpu_custom_call.1} parent=1 // pred_fallthru
      _
    // Predicated region
    $region14: #{tpu_custom_call.1} parent=1 // pred_check
      _
    $region15: #{tpu_custom_call.1} parent=1 // pred_check_branch
      %38 = sbr.rel (0) target = $region17
    $region16: #{tpu_custom_call.1} parent=1 // pred_region
      %39 = dma.done [#allocation6], 2048
    $region17: #{tpu_custom_call.1} parent=1 // pred_fallthru
      _
    %v40 = vld [vmem:[#allocation2] sm:$0xff]
    %v41 = vld [vmem:[#allocation5] sm:$0xff]
    %v42 = vld [vmem:[#allocation5 + $0x8] sm:$0xff]
    %vm43 = vcmask 130048
    %v45 = vsel %vm43, %v40, 0
    %47 = vmatprep.subr.mxu0 0.0
    %48 = vmatpush1.msra.mxu0 %v41
    %49 = vmatprep.subr.mxu0 0.0
    %50 = vmatpush1.msra.mxu0 %v42
    %51 = vmatprep.subr.mxu0 0.0
    %52 = vmatpush1.msra.mxu0 0.0
    %53 = vmatprep.subr.mxu0 0.0
    %54 = vmatpush1.msra.mxu0 0.0
    %55 = vmatprep.subr.mxu0 0.0
    %56 = vmatpush1.msra.mxu0 0.0
    %57 = vmatprep.subr.mxu0 0.0
    %58 = vmatpush1.msra.mxu0 0.0
    %59 = vmatprep.subr.mxu0 0.0
    %60 = vmatpush1.msra.mxu0 0.0
    %61 = vmatprep.subr.mxu0 0.0
    %62 = vmatpush1.msra.mxu0 0.0
    %63 = vmatprep.subr.mxu0 0.0
    %64 = vmatpush1.msra.mxu0 0.0
    %65 = vmatprep.subr.mxu0 0.0
    %66 = vmatpush1.msra.mxu0 0.0
    %67 = vmatprep.subr.mxu0 0.0
    %68 = vmatpush1.msra.mxu0 0.0
    %69 = vmatprep.subr.mxu0 0.0
    %70 = vmatpush1.msra.mxu0 0.0
    %71 = vmatprep.subr.mxu0 0.0
    %72 = vmatpush1.msra.mxu0 0.0
    %73 = vmatprep.subr.mxu0 0.0
    %74 = vmatpush1.msra.mxu0 0.0
    %75 = vmatprep.subr.mxu0 0.0
    %76 = vmatpush1.msra.mxu0 0.0
    %77 = vmatprep.subr.mxu0 0.0
    %78 = vmatpush1.msra.mxu0 0.0
    %79 = vmatprep.subr.mxu0 0.0
    %80 = vmatpush1.msra.mxu0 0.0
    %81 = vmatprep.subr.mxu0 0.0
    %82 = vmatpush1.msra.mxu0 0.0
    %83 = vmatprep.subr.mxu0 0.0
    %84 = vmatpush1.msra.mxu0 0.0
    %85 = vmatprep.subr.mxu0 0.0
    %86 = vmatpush1.msra.mxu0 0.0
    %87 = vmatprep.subr.mxu0 0.0
    %88 = vmatpush1.msra.mxu0 0.0
    %89 = vmatprep.subr.mxu0 0.0
    %90 = vmatpush1.msra.mxu0 0.0
    %91 = vmatprep.subr.mxu0 0.0
    %92 = vmatpush1.msra.mxu0 0.0
    %93 = vmatprep.subr.mxu0 0.0
    %94 = vmatpush1.msra.mxu0 0.0
    %95 = vmatprep.subr.mxu0 0.0
    %96 = vmatpush1.msra.mxu0 0.0
    %97 = vmatprep.subr.mxu0 0.0
    %98 = vmatpush1.msra.mxu0 0.0
    %99 = vmatprep.subr.mxu0 0.0
    %100 = vmatpush1.msra.mxu0 0.0
    %101 = vmatprep.subr.mxu0 0.0
    %102 = vmatpush1.msra.mxu0 0.0
    %103 = vmatprep.subr.mxu0 0.0
    %104 = vmatpush1.msra.mxu0 0.0
    %105 = vmatprep.subr.mxu0 0.0
    %106 = vmatpush1.msra.mxu0 0.0
    %107 = vmatprep.subr.mxu0 0.0
    %108 = vmatpush1.msra.mxu0 0.0
    %109 = vmatprep.subr.mxu0 0.0
    %110 = vmatpush1.msra.mxu0 0.0
    %111 = vmatprep.mubr.f32.mxu0 0.0
    %112 = vmatmul.mubr.f32.gmra.mrb[0].mxu0 %v45
    %v113 = vpop.f32.mrb[0].mxu0
    %v114 = vadd.f32 0.0, %v113
    %v115 = vpop.f32.mrb[0].mxu0
    %116 = vdwg.mxu0
    %s117 = scalar_lea.vmem [#allocation2], 8
    %v118 = vld [vmem:[%s117] sm:$0xff]
    %s119 = scalar_lea.vmem [#allocation5], 16
    %v120 = vld [vmem:[%s119] sm:$0xff]
    %v121 = vld [vmem:[%s119 + $0x8] sm:$0xff]
    %v123 = vsel %vm43, %v118, 0
    %125 = vmatprep.subr.mxu0 0.0
    %126 = vmatpush1.msra.mxu0 %v120
    %127 = vmatprep.subr.mxu0 0.0
    %128 = vmatpush1.msra.mxu0 %v121
    %129 = vmatprep.subr.mxu0 0.0
    %130 = vmatpush1.msra.mxu0 0.0
    %131 = vmatprep.subr.mxu0 0.0
    %132 = vmatpush1.msra.mxu0 0.0
    %133 = vmatprep.subr.mxu0 0.0
    %134 = vmatpush1.msra.mxu0 0.0
    %135 = vmatprep.subr.mxu0 0.0
    %136 = vmatpush1.msra.mxu0 0.0
    %137 = vmatprep.subr.mxu0 0.0
    %138 = vmatpush1.msra.mxu0 0.0
    %139 = vmatprep.subr.mxu0 0.0
    %140 = vmatpush1.msra.mxu0 0.0
    %141 = vmatprep.subr.mxu0 0.0
    %142 = vmatpush1.msra.mxu0 0.0
    %143 = vmatprep.subr.mxu0 0.0
    %144 = vmatpush1.msra.mxu0 0.0
    %145 = vmatprep.subr.mxu0 0.0
    %146 = vmatpush1.msra.mxu0 0.0
    %147 = vmatprep.subr.mxu0 0.0
    %148 = vmatpush1.msra.mxu0 0.0
    %149 = vmatprep.subr.mxu0 0.0
    %150 = vmatpush1.msra.mxu0 0.0
    %151 = vmatprep.subr.mxu0 0.0
    %152 = vmatpush1.msra.mxu0 0.0
    %153 = vmatprep.subr.mxu0 0.0
    %154 = vmatpush1.msra.mxu0 0.0
    %155 = vmatprep.subr.mxu0 0.0
    %156 = vmatpush1.msra.mxu0 0.0
    %157 = vmatprep.subr.mxu0 0.0
    %158 = vmatpush1.msra.mxu0 0.0
    %159 = vmatprep.subr.mxu0 0.0
    %160 = vmatpush1.msra.mxu0 0.0
    %161 = vmatprep.subr.mxu0 0.0
    %162 = vmatpush1.msra.mxu0 0.0
    %163 = vmatprep.subr.mxu0 0.0
    %164 = vmatpush1.msra.mxu0 0.0
    %165 = vmatprep.subr.mxu0 0.0
    %166 = vmatpush1.msra.mxu0 0.0
    %167 = vmatprep.subr.mxu0 0.0
    %168 = vmatpush1.msra.mxu0 0.0
    %169 = vmatprep.subr.mxu0 0.0
    %170 = vmatpush1.msra.mxu0 0.0
    %171 = vmatprep.subr.mxu0 0.0
    %172 = vmatpush1.msra.mxu0 0.0
    %173 = vmatprep.subr.mxu0 0.0
    %174 = vmatpush1.msra.mxu0 0.0
    %175 = vmatprep.subr.mxu0 0.0
    %176 = vmatpush1.msra.mxu0 0.0
    %177 = vmatprep.subr.mxu0 0.0
    %178 = vmatpush1.msra.mxu0 0.0
    %179 = vmatprep.subr.mxu0 0.0
    %180 = vmatpush1.msra.mxu0 0.0
    %181 = vmatprep.subr.mxu0 0.0
    %182 = vmatpush1.msra.mxu0 0.0
    %183 = vmatprep.subr.mxu0 0.0
    %184 = vmatpush1.msra.mxu0 0.0
    %185 = vmatprep.subr.mxu0 0.0
    %186 = vmatpush1.msra.mxu0 0.0
    %187 = vmatprep.subr.mxu0 0.0
    %188 = vmatpush1.msra.mxu0 0.0
    %189 = vmatprep.mubr.f32.mxu0 0.0
    %190 = vmatmul.mubr.f32.gmra.mrb[0].mxu0 %v123
    %v191 = vpop.f32.mrb[0].mxu0
    %v192 = vadd.f32 0.0, %v191
    %v193 = vpop.f32.mrb[0].mxu0
    %194 = vdwg.mxu0
    %s195 = scalar_lea.vmem [#allocation2], 16
    %v196 = vld [vmem:[%s195] sm:$0xff]
    %s197 = scalar_lea.vmem [#allocation5], 32
    %v198 = vld [vmem:[%s197] sm:$0xff]
    %v199 = vld [vmem:[%s197 + $0x8] sm:$0xff]
    %v201 = vsel %vm43, %v196, 0
    %203 = vmatprep.subr.mxu0 0.0
    %204 = vmatpush1.msra.mxu0 %v198
    %205 = vmatprep.subr.mxu0 0.0
    %206 = vmatpush1.msra.mxu0 %v199
    %207 = vmatprep.subr.mxu0 0.0
    %208 = vmatpush1.msra.mxu0 0.0
    %209 = vmatprep.subr.mxu0 0.0
    %210 = vmatpush1.msra.mxu0 0.0
    %211 = vmatprep.subr.mxu0 0.0
    %212 = vmatpush1.msra.mxu0 0.0
    %213 = vmatprep.subr.mxu0 0.0
    %214 = vmatpush1.msra.mxu0 0.0
    %215 = vmatprep.subr.mxu0 0.0
    %216 = vmatpush1.msra.mxu0 0.0
    %217 = vmatprep.subr.mxu0 0.0
    %218 = vmatpush1.msra.mxu0 0.0
    %219 = vmatprep.subr.mxu0 0.0
    %220 = vmatpush1.msra.mxu0 0.0
    %221 = vmatprep.subr.mxu0 0.0
    %222 = vmatpush1.msra.mxu0 0.0
    %223 = vmatprep.subr.mxu0 0.0
    %224 = vmatpush1.msra.mxu0 0.0
    %225 = vmatprep.subr.mxu0 0.0
    %226 = vmatpush1.msra.mxu0 0.0
    %227 = vmatprep.subr.mxu0 0.0
    %228 = vmatpush1.msra.mxu0 0.0
    %229 = vmatprep.subr.mxu0 0.0
    %230 = vmatpush1.msra.mxu0 0.0
    %231 = vmatprep.subr.mxu0 0.0
    %232 = vmatpush1.msra.mxu0 0.0
    %233 = vmatprep.subr.mxu0 0.0
    %234 = vmatpush1.msra.mxu0 0.0
    %235 = vmatprep.subr.mxu0 0.0
    %236 = vmatpush1.msra.mxu0 0.0
    %237 = vmatprep.subr.mxu0 0.0
    %238 = vmatpush1.msra.mxu0 0.0
    %239 = vmatprep.subr.mxu0 0.0
    %240 = vmatpush1.msra.mxu0 0.0
    %241 = vmatprep.subr.mxu0 0.0
    %242 = vmatpush1.msra.mxu0 0.0
    %243 = vmatprep.subr.mxu0 0.0
    %244 = vmatpush1.msra.mxu0 0.0
    %245 = vmatprep.subr.mxu0 0.0
    %246 = vmatpush1.msra.mxu0 0.0
    %247 = vmatprep.subr.mxu0 0.0
    %248 = vmatpush1.msra.mxu0 0.0
    %249 = vmatprep.subr.mxu0 0.0
    %250 = vmatpush1.msra.mxu0 0.0
    %251 = vmatprep.subr.mxu0 0.0
    %252 = vmatpush1.msra.mxu0 0.0
    %253 = vmatprep.subr.mxu0 0.0
    %254 = vmatpush1.msra.mxu0 0.0
    %255 = vmatprep.subr.mxu0 0.0
    %256 = vmatpush1.msra.mxu0 0.0
    %257 = vmatprep.subr.mxu0 0.0
    %258 = vmatpush1.msra.mxu0 0.0
    %259 = vmatprep.subr.mxu0 0.0
    %260 = vmatpush1.msra.mxu0 0.0
    %261 = vmatprep.subr.mxu0 0.0
    %262 = vmatpush1.msra.mxu0 0.0
    %263 = vmatprep.subr.mxu0 0.0
    %264 = vmatpush1.msra.mxu0 0.0
    %265 = vmatprep.subr.mxu0 0.0
    %266 = vmatpush1.msra.mxu0 0.0
    %267 = vmatprep.mubr.f32.mxu0 0.0
    %268 = vmatmul.mubr.f32.gmra.mrb[0].mxu0 %v201
    %v269 = vpop.f32.mrb[0].mxu0
    %v270 = vadd.f32 0.0, %v269
    %v271 = vpop.f32.mrb[0].mxu0
    %272 = vdwg.mxu0
    %s273 = scalar_lea.vmem [#allocation2], 24
    %v274 = vld [vmem:[%s273] sm:$0xff]
    %s275 = scalar_lea.vmem [#allocation5], 48
    %v276 = vld [vmem:[%s275] sm:$0xff]
    %v277 = vld [vmem:[%s275 + $0x8] sm:$0xff]
    %v279 = vsel %vm43, %v274, 0
    %281 = vmatprep.subr.mxu0 0.0
    %282 = vmatpush1.msra.mxu0 %v276
    %283 = vmatprep.subr.mxu0 0.0
    %284 = vmatpush1.msra.mxu0 %v277
    %285 = vmatprep.subr.mxu0 0.0
    %286 = vmatpush1.msra.mxu0 0.0
    %287 = vmatprep.subr.mxu0 0.0
    %288 = vmatpush1.msra.mxu0 0.0
    %289 = vmatprep.subr.mxu0 0.0
    %290 = vmatpush1.msra.mxu0 0.0
    %291 = vmatprep.subr.mxu0 0.0
    %292 = vmatpush1.msra.mxu0 0.0
    %293 = vmatprep.subr.mxu0 0.0
    %294 = vmatpush1.msra.mxu0 0.0
    %295 = vmatprep.subr.mxu0 0.0
    %296 = vmatpush1.msra.mxu0 0.0
    %297 = vmatprep.subr.mxu0 0.0
    %298 = vmatpush1.msra.mxu0 0.0
    %299 = vmatprep.subr.mxu0 0.0
    %300 = vmatpush1.msra.mxu0 0.0
    %301 = vmatprep.subr.mxu0 0.0
    %302 = vmatpush1.msra.mxu0 0.0
    %303 = vmatprep.subr.mxu0 0.0
    %304 = vmatpush1.msra.mxu0 0.0
    %305 = vmatprep.subr.mxu0 0.0
    %306 = vmatpush1.msra.mxu0 0.0
    %307 = vmatprep.subr.mxu0 0.0
    %308 = vmatpush1.msra.mxu0 0.0
    %309 = vmatprep.subr.mxu0 0.0
    %310 = vmatpush1.msra.mxu0 0.0
    %311 = vmatprep.subr.mxu0 0.0
    %312 = vmatpush1.msra.mxu0 0.0
    %313 = vmatprep.subr.mxu0 0.0
    %314 = vmatpush1.msra.mxu0 0.0
    %315 = vmatprep.subr.mxu0 0.0
    %316 = vmatpush1.msra.mxu0 0.0
    %317 = vmatprep.subr.mxu0 0.0
    %318 = vmatpush1.msra.mxu0 0.0
    %319 = vmatprep.subr.mxu0 0.0
    %320 = vmatpush1.msra.mxu0 0.0
    %321 = vmatprep.subr.mxu0 0.0
    %322 = vmatpush1.msra.mxu0 0.0
    %323 = vmatprep.subr.mxu0 0.0
    %324 = vmatpush1.msra.mxu0 0.0
    %325 = vmatprep.subr.mxu0 0.0
    %326 = vmatpush1.msra.mxu0 0.0
    %327 = vmatprep.subr.mxu0 0.0
    %328 = vmatpush1.msra.mxu0 0.0
    %329 = vmatprep.subr.mxu0 0.0
    %330 = vmatpush1.msra.mxu0 0.0
    %331 = vmatprep.subr.mxu0 0.0
    %332 = vmatpush1.msra.mxu0 0.0
    %333 = vmatprep.subr.mxu0 0.0
    %334 = vmatpush1.msra.mxu0 0.0
    %335 = vmatprep.subr.mxu0 0.0
    %336 = vmatpush1.msra.mxu0 0.0
    %337 = vmatprep.subr.mxu0 0.0
    %338 = vmatpush1.msra.mxu0 0.0
    %339 = vmatprep.subr.mxu0 0.0
    %340 = vmatpush1.msra.mxu0 0.0
    %341 = vmatprep.subr.mxu0 0.0
    %342 = vmatpush1.msra.mxu0 0.0
    %343 = vmatprep.subr.mxu0 0.0
    %344 = vmatpush1.msra.mxu0 0.0
    %345 = vmatprep.mubr.f32.mxu0 0.0
    %346 = vmatmul.mubr.f32.gmra.mrb[0].mxu0 %v279
    %v347 = vpop.f32.mrb[0].mxu0
    %v348 = vadd.f32 0.0, %v347
    %v349 = vpop.f32.mrb[0].mxu0
    %350 = vdwg.mxu0
    %s351 = scalar_lea.vmem [#allocation2], 32
    %v352 = vld [vmem:[%s351] sm:$0xff]
    %s353 = scalar_lea.vmem [#allocation5], 64
    %v354 = vld [vmem:[%s353] sm:$0xff]
    %v355 = vld [vmem:[%s353 + $0x8] sm:$0xff]
    %v357 = vsel %vm43, %v352, 0
    %359 = vmatprep.subr.mxu0 0.0
    %360 = vmatpush1.msra.mxu0 %v354
    %361 = vmatprep.subr.mxu0 0.0
    %362 = vmatpush1.msra.mxu0 %v355
    %363 = vmatprep.subr.mxu0 0.0
    %364 = vmatpush1.msra.mxu0 0.0
    %365 = vmatprep.subr.mxu0 0.0
    %366 = vmatpush1.msra.mxu0 0.0
    %367 = vmatprep.subr.mxu0 0.0
    %368 = vmatpush1.msra.mxu0 0.0
    %369 = vmatprep.subr.mxu0 0.0
    %370 = vmatpush1.msra.mxu0 0.0
    %371 = vmatprep.subr.mxu0 0.0
    %372 = vmatpush1.msra.mxu0 0.0
    %373 = vmatprep.subr.mxu0 0.0
    %374 = vmatpush1.msra.mxu0 0.0
    %375 = vmatprep.subr.mxu0 0.0
    %376 = vmatpush1.msra.mxu0 0.0
    %377 = vmatprep.subr.mxu0 0.0
    %378 = vmatpush1.msra.mxu0 0.0
    %379 = vmatprep.subr.mxu0 0.0
    %380 = vmatpush1.msra.mxu0 0.0
    %381 = vmatprep.subr.mxu0 0.0
    %382 = vmatpush1.msra.mxu0 0.0
    %383 = vmatprep.subr.mxu0 0.0
    %384 = vmatpush1.msra.mxu0 0.0
    %385 = vmatprep.subr.mxu0 0.0
    %386 = vmatpush1.msra.mxu0 0.0
    %387 = vmatprep.subr.mxu0 0.0
    %388 = vmatpush1.msra.mxu0 0.0
    %389 = vmatprep.subr.mxu0 0.0
    %390 = vmatpush1.msra.mxu0 0.0
    %391 = vmatprep.subr.mxu0 0.0
    %392 = vmatpush1.msra.mxu0 0.0
    %393 = vmatprep.subr.mxu0 0.0
    %394 = vmatpush1.msra.mxu0 0.0
    %395 = vmatprep.subr.mxu0 0.0
    %396 = vmatpush1.msra.mxu0 0.0
    %397 = vmatprep.subr.mxu0 0.0
    %398 = vmatpush1.msra.mxu0 0.0
    %399 = vmatprep.subr.mxu0 0.0
    %400 = vmatpush1.msra.mxu0 0.0
    %401 = vmatprep.subr.mxu0 0.0
    %402 = vmatpush1.msra.mxu0 0.0
    %403 = vmatprep.subr.mxu0 0.0
    %404 = vmatpush1.msra.mxu0 0.0
    %405 = vmatprep.subr.mxu0 0.0
    %406 = vmatpush1.msra.mxu0 0.0
    %407 = vmatprep.subr.mxu0 0.0
    %408 = vmatpush1.msra.mxu0 0.0
    %409 = vmatprep.subr.mxu0 0.0
    %410 = vmatpush1.msra.mxu0 0.0
    %411 = vmatprep.subr.mxu0 0.0
    %412 = vmatpush1.msra.mxu0 0.0
    %413 = vmatprep.subr.mxu0 0.0
    %414 = vmatpush1.msra.mxu0 0.0
    %415 = vmatprep.subr.mxu0 0.0
    %416 = vmatpush1.msra.mxu0 0.0
    %417 = vmatprep.subr.mxu0 0.0
    %418 = vmatpush1.msra.mxu0 0.0
    %419 = vmatprep.subr.mxu0 0.0
    %420 = vmatpush1.msra.mxu0 0.0
    %421 = vmatprep.subr.mxu0 0.0
    %422 = vmatpush1.msra.mxu0 0.0
    %423 = vmatprep.mubr.f32.mxu0 0.0
    %424 = vmatmul.mubr.f32.gmra.mrb[0].mxu0 %v357
    %v425 = vpop.f32.mrb[0].mxu0
    %v426 = vadd.f32 0.0, %v425
    %v427 = vpop.f32.mrb[0].mxu0
    %428 = vdwg.mxu0
    %s429 = scalar_lea.vmem [#allocation2], 40
    %v430 = vld [vmem:[%s429] sm:$0xff]
    %s431 = scalar_lea.vmem [#allocation5], 80
    %v432 = vld [vmem:[%s431] sm:$0xff]
    %v433 = vld [vmem:[%s431 + $0x8] sm:$0xff]
    %v435 = vsel %vm43, %v430, 0
    %437 = vmatprep.subr.mxu0 0.0
    %438 = vmatpush1.msra.mxu0 %v432
    %439 = vmatprep.subr.mxu0 0.0
    %440 = vmatpush1.msra.mxu0 %v433
    %441 = vmatprep.subr.mxu0 0.0
    %442 = vmatpush1.msra.mxu0 0.0
    %443 = vmatprep.subr.mxu0 0.0
    %444 = vmatpush1.msra.mxu0 0.0
    %445 = vmatprep.subr.mxu0 0.0
    %446 = vmatpush1.msra.mxu0 0.0
    %447 = vmatprep.subr.mxu0 0.0
    %448 = vmatpush1.msra.mxu0 0.0
    %449 = vmatprep.subr.mxu0 0.0
    %450 = vmatpush1.msra.mxu0 0.0
    %451 = vmatprep.subr.mxu0 0.0
    %452 = vmatpush1.msra.mxu0 0.0
    %453 = vmatprep.subr.mxu0 0.0
    %454 = vmatpush1.msra.mxu0 0.0
    %455 = vmatprep.subr.mxu0 0.0
    %456 = vmatpush1.msra.mxu0 0.0
    %457 = vmatprep.subr.mxu0 0.0
    %458 = vmatpush1.msra.mxu0 0.0
    %459 = vmatprep.subr.mxu0 0.0
    %460 = vmatpush1.msra.mxu0 0.0
    %461 = vmatprep.subr.mxu0 0.0
    %462 = vmatpush1.msra.mxu0 0.0
    %463 = vmatprep.subr.mxu0 0.0
    %464 = vmatpush1.msra.mxu0 0.0
    %465 = vmatprep.subr.mxu0 0.0
    %466 = vmatpush1.msra.mxu0 0.0
    %467 = vmatprep.subr.mxu0 0.0
    %468 = vmatpush1.msra.mxu0 0.0
    %469 = vmatprep.subr.mxu0 0.0
    %470 = vmatpush1.msra.mxu0 0.0
    %471 = vmatprep.subr.mxu0 0.0
    %472 = vmatpush1.msra.mxu0 0.0
    %473 = vmatprep.subr.mxu0 0.0
    %474 = vmatpush1.msra.mxu0 0.0
    %475 = vmatprep.subr.mxu0 0.0
    %476 = vmatpush1.msra.mxu0 0.0
    %477 = vmatprep.subr.mxu0 0.0
    %478 = vmatpush1.msra.mxu0 0.0
    %479 = vmatprep.subr.mxu0 0.0
    %480 = vmatpush1.msra.mxu0 0.0
    %481 = vmatprep.subr.mxu0 0.0
    %482 = vmatpush1.msra.mxu0 0.0
    %483 = vmatprep.subr.mxu0 0.0
    %484 = vmatpush1.msra.mxu0 0.0
    %485 = vmatprep.subr.mxu0 0.0
    %486 = vmatpush1.msra.mxu0 0.0
    %487 = vmatprep.subr.mxu0 0.0
    %488 = vmatpush1.msra.mxu0 0.0
    %489 = vmatprep.subr.mxu0 0.0
    %490 = vmatpush1.msra.mxu0 0.0
    %491 = vmatprep.subr.mxu0 0.0
    %492 = vmatpush1.msra.mxu0 0.0
    %493 = vmatprep.subr.mxu0 0.0
    %494 = vmatpush1.msra.mxu0 0.0
    %495 = vmatprep.subr.mxu0 0.0
    %496 = vmatpush1.msra.mxu0 0.0
    %497 = vmatprep.subr.mxu0 0.0
    %498 = vmatpush1.msra.mxu0 0.0
    %499 = vmatprep.subr.mxu0 0.0
    %500 = vmatpush1.msra.mxu0 0.0
    %501 = vmatprep.mubr.f32.mxu0 0.0
    %502 = vmatmul.mubr.f32.gmra.mrb[0].mxu0 %v435
    %v503 = vpop.f32.mrb[0].mxu0
    %v504 = vadd.f32 0.0, %v503
    %v505 = vpop.f32.mrb[0].mxu0
    %506 = vdwg.mxu0
    %s507 = scalar_lea.vmem [#allocation2], 48
    %v508 = vld [vmem:[%s507] sm:$0xff]
    %s509 = scalar_lea.vmem [#allocation5], 96
    %v510 = vld [vmem:[%s509] sm:$0xff]
    %v511 = vld [vmem:[%s509 + $0x8] sm:$0xff]
    %v513 = vsel %vm43, %v508, 0
    %515 = vmatprep.subr.mxu0 0.0
    %516 = vmatpush1.msra.mxu0 %v510
    %517 = vmatprep.subr.mxu0 0.0
    %518 = vmatpush1.msra.mxu0 %v511
    %519 = vmatprep.subr.mxu0 0.0
    %520 = vmatpush1.msra.mxu0 0.0
    %521 = vmatprep.subr.mxu0 0.0
    %522 = vmatpush1.msra.mxu0 0.0
    %523 = vmatprep.subr.mxu0 0.0
    %524 = vmatpush1.msra.mxu0 0.0
    %525 = vmatprep.subr.mxu0 0.0
    %526 = vmatpush1.msra.mxu0 0.0
    %527 = vmatprep.subr.mxu0 0.0
    %528 = vmatpush1.msra.mxu0 0.0
    %529 = vmatprep.subr.mxu0 0.0
    %530 = vmatpush1.msra.mxu0 0.0
    %531 = vmatprep.subr.mxu0 0.0
    %532 = vmatpush1.msra.mxu0 0.0
    %533 = vmatprep.subr.mxu0 0.0
    %534 = vmatpush1.msra.mxu0 0.0
    %535 = vmatprep.subr.mxu0 0.0
    %536 = vmatpush1.msra.mxu0 0.0
    %537 = vmatprep.subr.mxu0 0.0
    %538 = vmatpush1.msra.mxu0 0.0
    %539 = vmatprep.subr.mxu0 0.0
    %540 = vmatpush1.msra.mxu0 0.0
    %541 = vmatprep.subr.mxu0 0.0
    %542 = vmatpush1.msra.mxu0 0.0
    %543 = vmatprep.subr.mxu0 0.0
    %544 = vmatpush1.msra.mxu0 0.0
    %545 = vmatprep.subr.mxu0 0.0
    %546 = vmatpush1.msra.mxu0 0.0
    %547 = vmatprep.subr.mxu0 0.0
    %548 = vmatpush1.msra.mxu0 0.0
    %549 = vmatprep.subr.mxu0 0.0
    %550 = vmatpush1.msra.mxu0 0.0
    %551 = vmatprep.subr.mxu0 0.0
    %552 = vmatpush1.msra.mxu0 0.0
    %553 = vmatprep.subr.mxu0 0.0
    %554 = vmatpush1.msra.mxu0 0.0
    %555 = vmatprep.subr.mxu0 0.0
    %556 = vmatpush1.msra.mxu0 0.0
    %557 = vmatprep.subr.mxu0 0.0
    %558 = vmatpush1.msra.mxu0 0.0
    %559 = vmatprep.subr.mxu0 0.0
    %560 = vmatpush1.msra.mxu0 0.0
    %561 = vmatprep.subr.mxu0 0.0
    %562 = vmatpush1.msra.mxu0 0.0
    %563 = vmatprep.subr.mxu0 0.0
    %564 = vmatpush1.msra.mxu0 0.0
    %565 = vmatprep.subr.mxu0 0.0
    %566 = vmatpush1.msra.mxu0 0.0
    %567 = vmatprep.subr.mxu0 0.0
    %568 = vmatpush1.msra.mxu0 0.0
    %569 = vmatprep.subr.mxu0 0.0
    %570 = vmatpush1.msra.mxu0 0.0
    %571 = vmatprep.subr.mxu0 0.0
    %572 = vmatpush1.msra.mxu0 0.0
    %573 = vmatprep.subr.mxu0 0.0
    %574 = vmatpush1.msra.mxu0 0.0
    %575 = vmatprep.subr.mxu0 0.0
    %576 = vmatpush1.msra.mxu0 0.0
    %577 = vmatprep.subr.mxu0 0.0
    %578 = vmatpush1.msra.mxu0 0.0
    %579 = vmatprep.mubr.f32.mxu0 0.0
    %580 = vmatmul.mubr.f32.gmra.mrb[0].mxu0 %v513
    %v581 = vpop.f32.mrb[0].mxu0
    %v582 = vadd.f32 0.0, %v581
    %v583 = vpop.f32.mrb[0].mxu0
    %584 = vdwg.mxu0
    %s585 = scalar_lea.vmem [#allocation2], 56
    %v586 = vld [vmem:[%s585] sm:$0xff]
    %s587 = scalar_lea.vmem [#allocation5], 112
    %v588 = vld [vmem:[%s587] sm:$0xff]
    %v589 = vld [vmem:[%s587 + $0x8] sm:$0xff]
    %v591 = vsel %vm43, %v586, 0
    %593 = vmatprep.subr.mxu0 0.0
    %594 = vmatpush1.msra.mxu0 %v588
    %595 = vmatprep.subr.mxu0 0.0
    %596 = vmatpush1.msra.mxu0 %v589
    %597 = vmatprep.subr.mxu0 0.0
    %598 = vmatpush1.msra.mxu0 0.0
    %599 = vmatprep.subr.mxu0 0.0
    %600 = vmatpush1.msra.mxu0 0.0
    %601 = vmatprep.subr.mxu0 0.0
    %602 = vmatpush1.msra.mxu0 0.0
    %603 = vmatprep.subr.mxu0 0.0
    %604 = vmatpush1.msra.mxu0 0.0
    %605 = vmatprep.subr.mxu0 0.0
    %606 = vmatpush1.msra.mxu0 0.0
    %607 = vmatprep.subr.mxu0 0.0
    %608 = vmatpush1.msra.mxu0 0.0
    %609 = vmatprep.subr.mxu0 0.0
    %610 = vmatpush1.msra.mxu0 0.0
    %611 = vmatprep.subr.mxu0 0.0
    %612 = vmatpush1.msra.mxu0 0.0
    %613 = vmatprep.subr.mxu0 0.0
    %614 = vmatpush1.msra.mxu0 0.0
    %615 = vmatprep.subr.mxu0 0.0
    %616 = vmatpush1.msra.mxu0 0.0
    %617 = vmatprep.subr.mxu0 0.0
    %618 = vmatpush1.msra.mxu0 0.0
    %619 = vmatprep.subr.mxu0 0.0
    %620 = vmatpush1.msra.mxu0 0.0
    %621 = vmatprep.subr.mxu0 0.0
    %622 = vmatpush1.msra.mxu0 0.0
    %623 = vmatprep.subr.mxu0 0.0
    %624 = vmatpush1.msra.mxu0 0.0
    %625 = vmatprep.subr.mxu0 0.0
    %626 = vmatpush1.msra.mxu0 0.0
    %627 = vmatprep.subr.mxu0 0.0
    %628 = vmatpush1.msra.mxu0 0.0
    %629 = vmatprep.subr.mxu0 0.0
    %630 = vmatpush1.msra.mxu0 0.0
    %631 = vmatprep.subr.mxu0 0.0
    %632 = vmatpush1.msra.mxu0 0.0
    %633 = vmatprep.subr.mxu0 0.0
    %634 = vmatpush1.msra.mxu0 0.0
    %635 = vmatprep.subr.mxu0 0.0
    %636 = vmatpush1.msra.mxu0 0.0
    %637 = vmatprep.subr.mxu0 0.0
    %638 = vmatpush1.msra.mxu0 0.0
    %639 = vmatprep.subr.mxu0 0.0
    %640 = vmatpush1.msra.mxu0 0.0
    %641 = vmatprep.subr.mxu0 0.0
    %642 = vmatpush1.msra.mxu0 0.0
    %643 = vmatprep.subr.mxu0 0.0
    %644 = vmatpush1.msra.mxu0 0.0
    %645 = vmatprep.subr.mxu0 0.0
    %646 = vmatpush1.msra.mxu0 0.0
    %647 = vmatprep.subr.mxu0 0.0
    %648 = vmatpush1.msra.mxu0 0.0
    %649 = vmatprep.subr.mxu0 0.0
    %650 = vmatpush1.msra.mxu0 0.0
    %651 = vmatprep.subr.mxu0 0.0
    %652 = vmatpush1.msra.mxu0 0.0
    %653 = vmatprep.subr.mxu0 0.0
    %654 = vmatpush1.msra.mxu0 0.0
    %655 = vmatprep.subr.mxu0 0.0
    %656 = vmatpush1.msra.mxu0 0.0
    %657 = vmatprep.mubr.f32.mxu0 0.0
    %658 = vmatmul.mubr.f32.gmra.mrb[0].mxu0 %v591
    %v659 = vpop.f32.mrb[0].mxu0
    %v660 = vadd.f32 0.0, %v659
    %v661 = vpop.f32.mrb[0].mxu0
    %662 = vdwg.mxu0
    %664 = vrot.lane.b32.xlu0 %v192, 32
    %v665 = vpop.permute.xlu0 %664
    %668 = vrot.lane.b32.xlu0 %v270, 64
    %v669 = vpop.permute.xlu0 %668
    %672 = vrot.lane.b32.xlu0 %v348, 96
    %v673 = vpop.permute.xlu0 %672
    %676 = vrot.lane.b32.xlu0 %v504, 32
    %v677 = vpop.permute.xlu0 %676
    %680 = vrot.lane.b32.xlu0 %v582, 64
    %v681 = vpop.permute.xlu0 %680
    %684 = vrot.lane.b32.xlu0 %v660, 96
    %v685 = vpop.permute.xlu0 %684
    %vm687 = vcmask 261120
    %v688 = vsel %vm687, %v114, %v665
    %vm689 = vcmask 523264
    %v690 = vsel %vm689, %v688, %v669
    %vm691 = vcmask 785408
    %v692 = vsel %vm691, %v690, %v673
    %v693 = vsel %vm687, %v426, %v677
    %v694 = vsel %vm689, %v693, %v681
    %v695 = vsel %vm691, %v694, %v685
    %696 = vst [vmem:[#allocation7] sm:$0xff] %v692
    %697 = vst [vmem:[#allocation7 + $0x8] sm:$0xff] %v695
    // Predicated region
    $region18: #{tpu_custom_call.1} parent=1 // pred_check
      _
    $region19: #{tpu_custom_call.1} parent=1 // pred_check_branch
      %699 = sbr.rel (0) target = $region21
    $region20: #{tpu_custom_call.1} parent=1 // pred_region
      %s701 = ssub.s32 256, 256
      %702 = vsyncadd [#allocation4], %s701
      %s704 = sshll.u32 [#allocation7], 4
      %s705 = int_to_ptr.vmem [resolvable:$true] %s704
      %707 = dma.vmem_to_hbm [thread:$0]  %s705, 256, %s2, [#allocation4]
    $region21: #{tpu_custom_call.1} parent=1 // pred_fallthru
      _
    // Predicated region
    $region22: #{tpu_custom_call.1} parent=1 // pred_check
      _
    $region23: #{tpu_custom_call.1} parent=1 // pred_check_branch
      %709 = sbr.rel (0) target = $region25
    $region24: #{tpu_custom_call.1} parent=1 // pred_region
      %710 = dma.done [#allocation4], 256
    $region25: #{tpu_custom_call.1} parent=1 // pred_fallthru
      _
    %711 = vsyncpa [#allocation3], 1
    %712 = vsyncpa [#allocation6], 1
    %713 = vsyncpa [#allocation4], 1

</llo_original>
